<compile_context>
chip_gen: v7x
topology: tpu7x:2x2x1
jax: 0.10.0
libtpu: 0.0.40
codegen_flags: <defaults>
</compile_context>

<pallas_src>
import functools

import jax
import jax.numpy as jnp
from jax.experimental import pallas as pl
from jax.experimental.pallas import tpu as pltpu


# ---------------------------------------------------------------------------
# Kernel bodies
# ---------------------------------------------------------------------------
def _mlp_scale(avg, mx, w1, b1, w2, b2):
    """sigmoid(MLP(avg) + MLP(max)) with the first-layer matmuls fused into one
    MXU pass (concat) and the second (affine) layer shared algebraically."""
    bt = avg.shape[0]
    p = jnp.concatenate([avg, mx], axis=0)                        # (2*bt, C) f32
    h = jnp.maximum(jnp.dot(p, w1, preferred_element_type=jnp.float32) + b1, 0.0)
    att = (jnp.dot(h[:bt] + h[bt:], w2, preferred_element_type=jnp.float32)
           + 2.0 * b2)                                            # (bt, C)
    return jax.nn.sigmoid(att)


def _ca_kernel_3d(x_ref, w1_ref, b1_ref, w2_ref, b2_ref, o_ref):
    """(bt, C, HW) blocks; used everywhere except the v5e/v6e flat path."""
    hw = x_ref.shape[-1]
    inv_hw = 1.0 / float(hw)                 # compile-time reciprocal, no divide

    # Re-read x_ref per use (the pipelined VMEM input buffer stays resident)
    # instead of binding it once -> no block-sized temp live across the MLP.
    avg = jnp.sum(x_ref[...].astype(jnp.float32), axis=-1) * inv_hw   # (bt, C)
    mx = jnp.max(x_ref[...].astype(jnp.float32), axis=-1)             # (bt, C)

    scale = _mlp_scale(avg, mx, w1_ref[...], b1_ref[...], w2_ref[...], b2_ref[...])

    o_ref[...] = (x_ref[...].astype(jnp.float32)
                  * scale[:, :, None]).astype(o_ref.dtype)


def _ca_kernel_flat(x_ref, w1_ref, b1_ref, w2_ref, b2_ref, o_ref, *, c, hw):
    """Flat (bt, C*HW) blocks: contiguous, unmasked DMAs/loads/stores when
    HW % 128 != 0.  Only used on big-VMEM chips (v5e/v6e), where the in-kernel
    relayouts hide under the HBM DMA."""
    bt = x_ref.shape[0]
    inv_hw = 1.0 / float(hw)

    x3 = x_ref[...].reshape(bt, c, hw).astype(jnp.float32)   # one relayout, reused
    avg = jnp.sum(x3, axis=-1) * inv_hw
    mx = jnp.max(x3, axis=-1)

    scale = _mlp_scale(avg, mx, w1_ref[...], b1_ref[...], w2_ref[...], b2_ref[...])

    out3 = (x3 * scale[:, :, None]).astype(o_ref.dtype)
    o_ref[...] = out3.reshape(bt, c * hw)                    # lane-dense store


# ---------------------------------------------------------------------------
# Wrapper
# ---------------------------------------------------------------------------
def _choose_bt(divisors, batch, max_images, bytes_per_image, min_steps):
    """Largest divisor of `batch` with bt <= max_images; prefer >= min_steps grid
    steps unless blocks are sub-MiB (then fixed per-step overhead dominates and
    we take the fewest steps possible)."""
    fit = [d for d in divisors if d <= max_images]
    if not fit:
        return None
    best = max(fit)
    if best * bytes_per_image < (1 << 20):      # tiny blocks: collapse grid
        return best
    for steps_req in range(min_steps, 0, -1):
        ok = [d for d in fit if batch // d >= steps_req]
        if ok:
            return max(ok)
    return best


def channel_attention(x_nchw, w1, b1, w2, b2, *, stream_dtype=None):
    """CBAM Channel_Attention forward (pool_types=['avg', 'max']).

    x_nchw: (B, C, H, W).  w1: (C, C//r), b1: (C//r,), w2: (C//r, C), b2: (C,)
    (Linear weights stored as (in, out) for x @ W).
    stream_dtype: optionally jnp.bfloat16 to halve HBM traffic (math stays f32;
                  output is returned in that dtype).
    """
    B, C, H, W = x_nchw.shape
    HW = H * W
    CHW = C * HW
    hidden = w1.shape[1]

    dtype = jnp.dtype(stream_dtype) if stream_dtype is not None else jnp.dtype(x_nchw.dtype)
    itemsize = dtype.itemsize

    # ---- hardware-aware block / VMEM sizing --------------------------------
    try:
        vmem_cap = int(pltpu.get_tpu_info().vmem_capacity_bytes)
    except Exception:
        vmem_cap = 64 << 20                     # conservative (v7x per-core VMEM)
    small_vmem = vmem_cap <= (64 << 20)         # v7x-like chip

    vmem_cap_clamp = (56 << 20) if small_vmem else (96 << 20)
    vmem_budget = vmem_cap_clamp - (4 << 20)    # params + headroom
    min_steps = 4 if small_vmem else 2          # >=2 steps per v7x TensorCore

    bytes_per_image = CHW * itemsize
    divisors = [d for d in range(1, B + 1) if B % d == 0]

    # Flat lane-dense layout only pays off on v5e/v6e when HW isn't 128-aligned.
    flat = (HW % 128 != 0) and not small_vmem
    bt = None
    vmem_per_image = 4 * bytes_per_image
    if flat:
        target_block = 12 << 20                 # room for f32 relayout temps
        vmem_per_image = 4 * bytes_per_image + 3 * CHW * 4
        max_images = max(1, min(target_block // max(bytes_per_image, 1),
                                vmem_budget // max(vmem_per_image, 1)))
        flat_divs = [d for d in divisors if d % 8 == 0 or d == B]
        bt = _choose_bt(flat_divs, B, max_images, bytes_per_image, min_steps)
        if bt is None:
            flat = False
    if not flat:
        target_block = (8 << 20) if small_vmem else (16 << 20)
        vmem_per_image = 4 * bytes_per_image
        max_images = max(1, min(target_block // max(bytes_per_image, 1),
                                vmem_budget // max(vmem_per_image, 1)))
        bt = _choose_bt(divisors, B, max_images, bytes_per_image, min_steps)
        if bt is None:
            bt = 1                              # single image exceeds the target

    grid = (B // bt,)
    param_bytes = 4 * (C * hidden + hidden + hidden * C + C)
    vmem_needed = bt * vmem_per_image + 2 * param_bytes + (2 << 20)
    vmem_limit = int(min(max(vmem_needed, 16 << 20), vmem_cap_clamp))

    # ---- operands -----------------------------------------------------------
    x3 = x_nchw.reshape(B, C, HW).astype(dtype)
    w1f = w1.astype(jnp.float32)
    w2f = w2.astype(jnp.float32)
    b1_2d = b1.reshape(1, hidden).astype(jnp.float32)
    b2_2d = b2.reshape(1, C).astype(jnp.float32)

    # Params use constant index maps -> not re-copied per step.
    param_specs = [
        pl.BlockSpec((C, hidden), lambda i: (0, 0)),
        pl.BlockSpec((1, hidden), lambda i: (0, 0)),
        pl.BlockSpec((hidden, C), lambda i: (0, 0)),
        pl.BlockSpec((1, C), lambda i: (0, 0)),
    ]

    if flat:
        kernel = functools.partial(_ca_kernel_flat, c=C, hw=HW)
        x_in = x3.reshape(B, CHW)               # free/contiguous wrapper reshape
        in_specs = [pl.BlockSpec((bt, CHW), lambda i: (i, 0))] + param_specs
        out_shape = jax.ShapeDtypeStruct((B, CHW), dtype)
        out_specs = pl.BlockSpec((bt, CHW), lambda i: (i, 0))
    else:
        kernel = _ca_kernel_3d
        x_in = x3
        in_specs = [pl.BlockSpec((bt, C, HW), lambda i: (i, 0, 0))] + param_specs
        out_shape = jax.ShapeDtypeStruct((B, C, HW), dtype)
        out_specs = pl.BlockSpec((bt, C, HW), lambda i: (i, 0, 0))

    cost = pl.CostEstimate(
        flops=int(3 * B * CHW + 6 * B * C * hidden),
        transcendentals=int(B * C),
        bytes_accessed=int(2 * B * CHW * itemsize + param_bytes),
    )

    out = pl.pallas_call(
        kernel,
        out_shape=out_shape,
        grid_spec=pltpu.PrefetchScalarGridSpec(
            num_scalar_prefetch=0,
            grid=grid,
            in_specs=in_specs,
            out_specs=out_specs,
        ),
        compiler_params=pltpu.CompilerParams(
            dimension_semantics=("parallel",),
            vmem_limit_bytes=vmem_limit,
        ),
        cost_estimate=cost,
    )(x_in, w1f, b1_2d, w2f, b2_2d)

    return out.reshape(B, C, H, W)


# ---------------------------------------------------------------------------
# Pure-JAX reference mirroring the PyTorch module
# ---------------------------------------------------------------------------
def channel_attention_ref(x, w1, b1, w2, b2):
    avg = jnp.mean(x, axis=(2, 3))                # (B, C)
    mx = jnp.max(x, axis=(2, 3))                  # (B, C)

    def mlp(p):
        h = jnp.maximum(p @ w1 + b1, 0.0)
        return h @ w2 + b2

    att = mlp(avg) + mlp(mx)
    scale = jax.nn.sigmoid(att)[:, :, None, None]
    return x * scale


if __name__ == "__main__":
    key = jax.random.PRNGKey(0)
    k_x, k_w1, k_b1, k_w2, k_b2 = jax.random.split(key, 5)

    # Module config: gate_channels=64, reduction_ratio=16, pools = ['avg', 'max']
    B, C, H, W = 2, 64, 16, 16
    reduction_ratio = 16
    hidden = C // reduction_ratio  # 4

    x = jax.random.normal(k_x, (B, C, H, W), dtype=jnp.float32)
    w1 = jax.random.normal(k_w1, (C, hidden), dtype=jnp.float32) * 0.1
    b1 = jax.random.normal(k_b1, (hidden,), dtype=jnp.float32) * 0.1
    w2 = jax.random.normal(k_w2, (hidden, C), dtype=jnp.float32) * 0.1
    b2 = jax.random.normal(k_b2, (C,), dtype=jnp.float32) * 0.1

    # --- f32 path: exact parity with the reference ---------------------------
    out = jax.block_until_ready(channel_attention(x, w1, b1, w2, b2))
    ref = channel_attention_ref(x, w1, b1, w2, b2)
    assert out.shape == (B, C, H, W)
    assert out.dtype == jnp.float32
    assert jnp.allclose(out, ref, atol=1e-4, rtol=1e-4), "f32 mismatch vs reference"

    # --- bf16 streaming path: half the HBM bytes, math kept in f32 -----------
    out_bf16 = jax.block_until_ready(
        channel_attention(x, w1, b1, w2, b2, stream_dtype=jnp.bfloat16))
    ref_bf16 = channel_attention_ref(
        x.astype(jnp.bfloat16).astype(jnp.float32), w1, b1, w2, b2)
    assert out_bf16.shape == (B, C, H, W)
    assert out_bf16.dtype == jnp.bfloat16
    assert jnp.allclose(out_bf16.astype(jnp.float32), ref_bf16,
                        atol=3e-2, rtol=3e-2), "bf16 mismatch vs reference"

    print("KERNEL_OK")
</pallas_src>

<mosaic_0001>
module attributes {stable_mosaic.version = 11 : i64} {
  func.func @_ca_kernel_3d(%arg0: i32, %arg1: memref<2x64x256xf32, #tpu.memory_space<vmem>>, %arg2: memref<64x4xf32, #tpu.memory_space<vmem>>, %arg3: memref<1x4xf32, #tpu.memory_space<vmem>>, %arg4: memref<4x64xf32, #tpu.memory_space<vmem>>, %arg5: memref<1x64xf32, #tpu.memory_space<vmem>>, %arg6: memref<2x64x256xf32, #tpu.memory_space<vmem>>) attributes {dimension_semantics = [#tpu.dimension_semantics<parallel>], iteration_bounds = array<i64: 1>, scalar_prefetch = 0 : i64, scratch_operands = 0 : i64, tpu.core_type = #tpu.core_type<tc>, window_params = [{transform_indices = @transform_0, window_bounds = array<i64: 2, 64, 256>}, {pipeline_mode = #tpu.pipeline_mode<synchronous>, transform_indices = @transform_1, window_bounds = array<i64: 64, 4>}, {pipeline_mode = #tpu.pipeline_mode<synchronous>, transform_indices = @transform_2, window_bounds = array<i64: 1, 4>}, {pipeline_mode = #tpu.pipeline_mode<synchronous>, transform_indices = @transform_3, window_bounds = array<i64: 4, 64>}, {pipeline_mode = #tpu.pipeline_mode<synchronous>, transform_indices = @transform_4, window_bounds = array<i64: 1, 64>}, {transform_indices = @transform_5, window_bounds = array<i64: 2, 64, 256>}]} {
    %c0 = arith.constant 0 : index
    %c0_0 = arith.constant 0 : index
    %c0_1 = arith.constant 0 : index
    %0 = vector.load %arg1[%c0, %c0_0, %c0_1] : memref<2x64x256xf32, #tpu.memory_space<vmem>>, vector<2x64x256xf32>
    %cst = arith.constant dense<0.000000e+00> : vector<2x64xf32>
    %1 = vector.multi_reduction <add>, %0, %cst [2] : vector<2x64x256xf32> to vector<2x64xf32>
    %cst_2 = arith.constant 3.906250e-03 : f32
    %2 = vector.broadcast %cst_2 : f32 to vector<2x64xf32>
    %3 = arith.mulf %1, %2 : vector<2x64xf32>
    %c0_3 = arith.constant 0 : index
    %c0_4 = arith.constant 0 : index
    %c0_5 = arith.constant 0 : index
    %4 = vector.load %arg1[%c0_3, %c0_4, %c0_5] : memref<2x64x256xf32, #tpu.memory_space<vmem>>, vector<2x64x256xf32>
    %cst_6 = arith.constant dense<0xFF800000> : vector<2x64xf32>
    %5 = vector.multi_reduction <maximumf>, %4, %cst_6 [2] : vector<2x64x256xf32> to vector<2x64xf32>
    %c0_7 = arith.constant 0 : index
    %c0_8 = arith.constant 0 : index
    %6 = vector.load %arg2[%c0_7, %c0_8] : memref<64x4xf32, #tpu.memory_space<vmem>>, vector<64x4xf32>
    %c0_9 = arith.constant 0 : index
    %c0_10 = arith.constant 0 : index
    %7 = vector.load %arg3[%c0_9, %c0_10] : memref<1x4xf32, #tpu.memory_space<vmem>>, vector<1x4xf32>
    %c0_11 = arith.constant 0 : index
    %c0_12 = arith.constant 0 : index
    %8 = vector.load %arg4[%c0_11, %c0_12] : memref<4x64xf32, #tpu.memory_space<vmem>>, vector<4x64xf32>
    %c0_13 = arith.constant 0 : index
    %c0_14 = arith.constant 0 : index
    %9 = vector.load %arg5[%c0_13, %c0_14] : memref<1x64xf32, #tpu.memory_space<vmem>>, vector<1x64xf32>
    %10 = tpu.concatenate %3, %5 in 0 : vector<2x64xf32>, vector<2x64xf32> -> vector<4x64xf32>
    %cst_15 = arith.constant dense<0.000000e+00> : vector<4x4xf32>
    %11 = tpu.matmul %10, %6, %cst_15 {dimension_numbers = #tpu.dot_dimension_numbers<[1], [0], [0], [1], [0, 0, 1, 1], [], []>} : vector<4x64xf32>, vector<64x4xf32>, vector<4x4xf32> -> vector<4x4xf32>
    %12 = vector.broadcast %7 : vector<1x4xf32> to vector<4x4xf32>
    %13 = arith.addf %11, %12 : vector<4x4xf32>
    %cst_16 = arith.constant 0.000000e+00 : f32
    %14 = vector.broadcast %cst_16 : f32 to vector<4x4xf32>
    %15 = arith.maximumf %13, %14 : vector<4x4xf32>
    %16 = vector.extract_strided_slice %15 {offsets = [0, 0], sizes = [2, 4], strides = [1, 1]} : vector<4x4xf32> to vector<2x4xf32>
    %17 = vector.extract_strided_slice %15 {offsets = [2, 0], sizes = [2, 4], strides = [1, 1]} : vector<4x4xf32> to vector<2x4xf32>
    %18 = arith.addf %16, %17 : vector<2x4xf32>
    %cst_17 = arith.constant dense<0.000000e+00> : vector<2x64xf32>
    %19 = tpu.matmul %18, %8, %cst_17 {dimension_numbers = #tpu.dot_dimension_numbers<[1], [0], [0], [1], [0, 0, 1, 1], [], []>} : vector<2x4xf32>, vector<4x64xf32>, vector<2x64xf32> -> vector<2x64xf32>
    %cst_18 = arith.constant 2.000000e+00 : f32
    %20 = vector.broadcast %cst_18 : f32 to vector<1x64xf32>
    %21 = arith.mulf %20, %9 : vector<1x64xf32>
    %22 = vector.broadcast %21 : vector<1x64xf32> to vector<2x64xf32>
    %23 = arith.addf %19, %22 : vector<2x64xf32>
    %24 = arith.negf %23 : vector<2x64xf32>
    %25 = math.exp %24 : vector<2x64xf32>
    %cst_19 = arith.constant 1.000000e+00 : f32
    %26 = vector.broadcast %cst_19 : f32 to vector<2x64xf32>
    %27 = arith.addf %26, %25 : vector<2x64xf32>
    %28 = arith.divf %26, %27 : vector<2x64xf32>
    %c0_20 = arith.constant 0 : index
    %c0_21 = arith.constant 0 : index
    %c0_22 = arith.constant 0 : index
    %29 = vector.load %arg1[%c0_20, %c0_21, %c0_22] : memref<2x64x256xf32, #tpu.memory_space<vmem>>, vector<2x64x256xf32>
    %30 = vector.shape_cast %28 : vector<2x64xf32> to vector<2x64x1xf32>
    %31 = vector.broadcast %30 : vector<2x64x1xf32> to vector<2x64x256xf32>
    %32 = arith.mulf %29, %31 : vector<2x64x256xf32>
    %c0_23 = arith.constant 0 : index
    %c0_24 = arith.constant 0 : index
    %c0_25 = arith.constant 0 : index
    %33 = vector.load %arg6[%c0_23, %c0_24, %c0_25] : memref<2x64x256xf32, #tpu.memory_space<vmem>>, vector<2x64x256xf32>
    tpu.vector_store %arg6[%c0_23, %c0_24, %c0_25], %32 {strides = array<i32>} : memref<2x64x256xf32, #tpu.memory_space<vmem>>, vector<2x64x256xf32>,
    return
  }
  func.func @transform_0(%arg0: i32) -> (i32, i32, i32) {
    %c0_i32 = arith.constant 0 : i32
    %c0_i32_0 = arith.constant 0 : i32
    %c0_i32_1 = arith.constant 0 : i32
    return %arg0, %c0_i32, %c0_i32_0 : i32, i32, i32
  }
  func.func @transform_1(%arg0: i32) -> (i32, i32) {
    %c0_i32 = arith.constant 0 : i32
    %c0_i32_0 = arith.constant 0 : i32
    %c0_i32_1 = arith.constant 0 : i32
    return %c0_i32, %c0_i32_0 : i32, i32
  }
  func.func @transform_2(%arg0: i32) -> (i32, i32) {
    %c0_i32 = arith.constant 0 : i32
    %c0_i32_0 = arith.constant 0 : i32
    %c0_i32_1 = arith.constant 0 : i32
    return %c0_i32, %c0_i32_0 : i32, i32
  }
  func.func @transform_3(%arg0: i32) -> (i32, i32) {
    %c0_i32 = arith.constant 0 : i32
    %c0_i32_0 = arith.constant 0 : i32
    %c0_i32_1 = arith.constant 0 : i32
    return %c0_i32, %c0_i32_0 : i32, i32
  }
  func.func @transform_4(%arg0: i32) -> (i32, i32) {
    %c0_i32 = arith.constant 0 : i32
    %c0_i32_0 = arith.constant 0 : i32
    %c0_i32_1 = arith.constant 0 : i32
    return %c0_i32, %c0_i32_0 : i32, i32
  }
  func.func @transform_5(%arg0: i32) -> (i32, i32, i32) {
    %c0_i32 = arith.constant 0 : i32
    %c0_i32_0 = arith.constant 0 : i32
    %c0_i32_1 = arith.constant 0 : i32
    return %arg0, %c0_i32, %c0_i32_0 : i32, i32, i32
  }
}

</mosaic_0001>

<llo_original>
// kernel: tpu_custom_call.1
$region0: #{tpu_custom_call.1}
  #allocation0 [shape = 'u32[]', space=smem, size = 0x4, offset = 0x4, fixed_abs, tag = 'smem constant byte address 0x4 - core index']
  #allocation1 [shape = 'u32[144,128]{1,0:T(1,128)}', space=vmem, size = 0x12000, scoped, tag = 'internal scratch']
  %s0 = inlined_call_operand.hbm [shape: f32[2,64,256], index: 0, kind: input, shape index: {}]
  %s1 = inlined_call_operand.vmem [shape: f32[64,4], index: 1, kind: input, shape index: {}]
  %s2 = inlined_call_operand.vmem [shape: f32[1,4], index: 2, kind: input, shape index: {}]
  %s3 = inlined_call_operand.vmem [shape: f32[4,64], index: 3, kind: input, shape index: {}]
  %s4 = inlined_call_operand.vmem [shape: f32[1,64], index: 4, kind: input, shape index: {}]
  %s5 = inlined_call_operand.hbm [shape: f32[2,64,256], index: 5, kind: output, shape index: {}]
  %s6 = sld [smem:[#allocation0]]
  $region34: #{tpu_custom_call.1} parent=0
    _
  %s8 = ssub.s32 1, %s6
  %s9 = scalar_select 0, %s8, %s6
  $region1: #{tpu_custom_call.1} parent=0
    #allocation2 [shape = 'u8[131072]{0}', space=vmem, size = 0x20000, scoped, tag = 'input window, operand 0, single buffered']
    #allocation3 [shape = 's32[1]{0}', space=sflag, size = 0x4, scoped, tag = 'scoped memory for tpu_custom_call.1']
    #allocation4 [shape = 's32[1]{0}', space=sflag, size = 0x4, scoped, tag = 'scoped memory for tpu_custom_call.1']
    #allocation5 [shape = 'u8[131072]{0}', space=vmem, size = 0x20000, scoped, tag = 'output window, operand 0, single buffered']
    %10 = vsyncpa [#allocation3], 0
    %11 = vsyncpa [#allocation4], 0
    // Predicated region
    $region2: #{tpu_custom_call.1} parent=1 // pred_check
      _
    $region3: #{tpu_custom_call.1} parent=1 // pred_check_branch
      %13 = sbr.rel (0) target = $region5
    $region4: #{tpu_custom_call.1} parent=1 // pred_region
      %s15 = ssub.s32 4096, 4096
      %16 = vsyncadd [#allocation3], %s15
      %s17 = sshll.u32 [#allocation2], 4
      %s18 = int_to_ptr.vmem [resolvable:$true] %s17
      %23 = dma.hbm_to_vmem [thread:$0]  %s0, 4096, %s18, [#allocation3], 256, 256, 16
    $region5: #{tpu_custom_call.1} parent=1 // pred_fallthru
      _
    // Predicated region
    $region6: #{tpu_custom_call.1} parent=1 // pred_check
      _
    $region7: #{tpu_custom_call.1} parent=1 // pred_check_branch
      %25 = sbr.rel (0) target = $region9
    $region8: #{tpu_custom_call.1} parent=1 // pred_region
      _
    $region9: #{tpu_custom_call.1} parent=1 // pred_fallthru
      _
    // Predicated region
    $region10: #{tpu_custom_call.1} parent=1 // pred_check
      _
    $region11: #{tpu_custom_call.1} parent=1 // pred_check_branch
      %27 = sbr.rel (0) target = $region13
    $region12: #{tpu_custom_call.1} parent=1 // pred_region
      _
    $region13: #{tpu_custom_call.1} parent=1 // pred_fallthru
      _
    // Predicated region
    $region14: #{tpu_custom_call.1} parent=1 // pred_check
      _
    $region15: #{tpu_custom_call.1} parent=1 // pred_check_branch
      %29 = sbr.rel (0) target = $region17
    $region16: #{tpu_custom_call.1} parent=1 // pred_region
      _
    $region17: #{tpu_custom_call.1} parent=1 // pred_fallthru
      _
    // Predicated region
    $region18: #{tpu_custom_call.1} parent=1 // pred_check
      _
    $region19: #{tpu_custom_call.1} parent=1 // pred_check_branch
      %31 = sbr.rel (0) target = $region21
    $region20: #{tpu_custom_call.1} parent=1 // pred_region
      _
    $region21: #{tpu_custom_call.1} parent=1 // pred_fallthru
      _
    // Predicated region
    $region22: #{tpu_custom_call.1} parent=1 // pred_check
      _
    $region23: #{tpu_custom_call.1} parent=1 // pred_check_branch
      %33 = sbr.rel (0) target = $region25
    $region24: #{tpu_custom_call.1} parent=1 // pred_region
      %34 = dma.done [#allocation3], 4096
    $region25: #{tpu_custom_call.1} parent=1 // pred_fallthru
      _
    %v35 = vld [vmem:[#allocation2] sm:$0xff]
    %v36 = vld [vmem:[#allocation2 + $0x8] sm:$0xff]
    %v37 = vld [vmem:[#allocation2 + $0x10] sm:$0xff]
    %v38 = vld [vmem:[#allocation2 + $0x18] sm:$0xff]
    %v39 = vld [vmem:[#allocation2 + $0x20] sm:$0xff]
    %v40 = vld [vmem:[#allocation2 + $0x28] sm:$0xff]
    %v41 = vld [vmem:[#allocation2 + $0x30] sm:$0xff]
    %v42 = vld [vmem:[#allocation2 + $0x38] sm:$0xff]
    %v43 = vld [vmem:[#allocation2 + $0x40] sm:$0xff]
    %v44 = vld [vmem:[#allocation2 + $0x48] sm:$0xff]
    %v45 = vld [vmem:[#allocation2 + $0x50] sm:$0xff]
    %v46 = vld [vmem:[#allocation2 + $0x58] sm:$0xff]
    %v47 = vld [vmem:[#allocation2 + $0x60] sm:$0xff]
    %v48 = vld [vmem:[#allocation2 + $0x68] sm:$0xff]
    %v49 = vld [vmem:[#allocation2 + $0x70] sm:$0xff]
    %v50 = vld [vmem:[#allocation2 + $0x78] sm:$0xff]
    %v51 = vld [vmem:[#allocation2 + $0x80] sm:$0xff]
    %v52 = vld [vmem:[#allocation2 + $0x88] sm:$0xff]
    %v53 = vld [vmem:[#allocation2 + $0x90] sm:$0xff]
    %v54 = vld [vmem:[#allocation2 + $0x98] sm:$0xff]
    %v55 = vld [vmem:[#allocation2 + $0xa0] sm:$0xff]
    %v56 = vld [vmem:[#allocation2 + $0xa8] sm:$0xff]
    %v57 = vld [vmem:[#allocation2 + $0xb0] sm:$0xff]
    %v58 = vld [vmem:[#allocation2 + $0xb8] sm:$0xff]
    %v59 = vld [vmem:[#allocation2 + $0xc0] sm:$0xff]
    %v60 = vld [vmem:[#allocation2 + $0xc8] sm:$0xff]
    %v61 = vld [vmem:[#allocation2 + $0xd0] sm:$0xff]
    %v62 = vld [vmem:[#allocation2 + $0xd8] sm:$0xff]
    %v63 = vld [vmem:[#allocation2 + $0xe0] sm:$0xff]
    %v64 = vld [vmem:[#allocation2 + $0xe8] sm:$0xff]
    %v65 = vld [vmem:[#allocation2 + $0xf0] sm:$0xff]
    %v66 = vld [vmem:[#allocation2 + $0xf8] sm:$0xff]
    %v67 = vadd.f32 %v35, %v36
    %68 = vadd.xlane.f32.xlu0 %v67
    %v69 = vpop.xlane.xlu0 %68
    %v70 = vadd.f32 %v37, %v38
    %71 = vadd.xlane.f32.xlu0 %v70
    %v72 = vpop.xlane.xlu0 %71
    %v73 = vadd.f32 %v39, %v40
    %74 = vadd.xlane.f32.xlu0 %v73
    %v75 = vpop.xlane.xlu0 %74
    %v76 = vadd.f32 %v41, %v42
    %77 = vadd.xlane.f32.xlu0 %v76
    %v78 = vpop.xlane.xlu0 %77
    %v79 = vadd.f32 %v43, %v44
    %80 = vadd.xlane.f32.xlu0 %v79
    %v81 = vpop.xlane.xlu0 %80
    %v82 = vadd.f32 %v45, %v46
    %83 = vadd.xlane.f32.xlu0 %v82
    %v84 = vpop.xlane.xlu0 %83
    %v85 = vadd.f32 %v47, %v48
    %86 = vadd.xlane.f32.xlu0 %v85
    %v87 = vpop.xlane.xlu0 %86
    %v88 = vadd.f32 %v49, %v50
    %89 = vadd.xlane.f32.xlu0 %v88
    %v90 = vpop.xlane.xlu0 %89
    %v91 = vadd.f32 %v51, %v52
    %92 = vadd.xlane.f32.xlu0 %v91
    %v93 = vpop.xlane.xlu0 %92
    %v94 = vadd.f32 %v53, %v54
    %95 = vadd.xlane.f32.xlu0 %v94
    %v96 = vpop.xlane.xlu0 %95
    %v97 = vadd.f32 %v55, %v56
    %98 = vadd.xlane.f32.xlu0 %v97
    %v99 = vpop.xlane.xlu0 %98
    %v100 = vadd.f32 %v57, %v58
    %101 = vadd.xlane.f32.xlu0 %v100
    %v102 = vpop.xlane.xlu0 %101
    %v103 = vadd.f32 %v59, %v60
    %104 = vadd.xlane.f32.xlu0 %v103
    %v105 = vpop.xlane.xlu0 %104
    %v106 = vadd.f32 %v61, %v62
    %107 = vadd.xlane.f32.xlu0 %v106
    %v108 = vpop.xlane.xlu0 %107
    %v109 = vadd.f32 %v63, %v64
    %110 = vadd.xlane.f32.xlu0 %v109
    %v111 = vpop.xlane.xlu0 %110
    %v112 = vadd.f32 %v65, %v66
    %113 = vadd.xlane.f32.xlu0 %v112
    %v114 = vpop.xlane.xlu0 %113
    %v115 = vmul.f32 %v69, 0.00390625
    %v116 = vmul.f32 %v72, 0.00390625
    %v117 = vmul.f32 %v75, 0.00390625
    %v118 = vmul.f32 %v78, 0.00390625
    %v119 = vmul.f32 %v81, 0.00390625
    %v120 = vmul.f32 %v84, 0.00390625
    %v121 = vmul.f32 %v87, 0.00390625
    %v122 = vmul.f32 %v90, 0.00390625
    %v123 = vmul.f32 %v93, 0.00390625
    %v124 = vmul.f32 %v96, 0.00390625
    %v125 = vmul.f32 %v99, 0.00390625
    %v126 = vmul.f32 %v102, 0.00390625
    %v127 = vmul.f32 %v105, 0.00390625
    %v128 = vmul.f32 %v108, 0.00390625
    %v129 = vmul.f32 %v111, 0.00390625
    %v130 = vmul.f32 %v114, 0.00390625
    %v131 = vmax.f32 %v35, %v36
    %132 = vmax.xlane.f32.xlu0 %v131
    %v133 = vpop.xlane.xlu0 %132
    %v134 = vmax.f32 %v37, %v38
    %135 = vmax.xlane.f32.xlu0 %v134
    %v136 = vpop.xlane.xlu0 %135
    %v137 = vmax.f32 %v39, %v40
    %138 = vmax.xlane.f32.xlu0 %v137
    %v139 = vpop.xlane.xlu0 %138
    %v140 = vmax.f32 %v41, %v42
    %141 = vmax.xlane.f32.xlu0 %v140
    %v142 = vpop.xlane.xlu0 %141
    %v143 = vmax.f32 %v43, %v44
    %144 = vmax.xlane.f32.xlu0 %v143
    %v145 = vpop.xlane.xlu0 %144
    %v146 = vmax.f32 %v45, %v46
    %147 = vmax.xlane.f32.xlu0 %v146
    %v148 = vpop.xlane.xlu0 %147
    %v149 = vmax.f32 %v47, %v48
    %150 = vmax.xlane.f32.xlu0 %v149
    %v151 = vpop.xlane.xlu0 %150
    %v152 = vmax.f32 %v49, %v50
    %153 = vmax.xlane.f32.xlu0 %v152
    %v154 = vpop.xlane.xlu0 %153
    %v155 = vmax.f32 %v51, %v52
    %156 = vmax.xlane.f32.xlu0 %v155
    %v157 = vpop.xlane.xlu0 %156
    %v158 = vmax.f32 %v53, %v54
    %159 = vmax.xlane.f32.xlu0 %v158
    %v160 = vpop.xlane.xlu0 %159
    %v161 = vmax.f32 %v55, %v56
    %162 = vmax.xlane.f32.xlu0 %v161
    %v163 = vpop.xlane.xlu0 %162
    %v164 = vmax.f32 %v57, %v58
    %165 = vmax.xlane.f32.xlu0 %v164
    %v166 = vpop.xlane.xlu0 %165
    %v167 = vmax.f32 %v59, %v60
    %168 = vmax.xlane.f32.xlu0 %v167
    %v169 = vpop.xlane.xlu0 %168
    %v170 = vmax.f32 %v61, %v62
    %171 = vmax.xlane.f32.xlu0 %v170
    %v172 = vpop.xlane.xlu0 %171
    %v173 = vmax.f32 %v63, %v64
    %174 = vmax.xlane.f32.xlu0 %v173
    %v175 = vpop.xlane.xlu0 %174
    %v176 = vmax.f32 %v65, %v66
    %177 = vmax.xlane.f32.xlu0 %v176
    %v178 = vpop.xlane.xlu0 %177
    %v179 = vld [vmem:[%s1] sm:$0xff]
    %v180 = vld [vmem:[%s1 + $0x8] sm:$0xff]
    %v181 = vld [vmem:[%s1 + $0x10] sm:$0xff]
    %v182 = vld [vmem:[%s1 + $0x18] sm:$0xff]
    %v183 = vld [vmem:[%s1 + $0x20] sm:$0xff]
    %v184 = vld [vmem:[%s1 + $0x28] sm:$0xff]
    %v185 = vld [vmem:[%s1 + $0x30] sm:$0xff]
    %v186 = vld [vmem:[%s1 + $0x38] sm:$0xff]
    %v187 = vld [vmem:[%s2] sm:$0x1]
    %v188 = vld [vmem:[%s3] sm:$0xf]
    %v189 = vld [vmem:[%s4] sm:$0x1]
    %v206 = vlaneseq
    %v207 = vand.u32 %v206, 127
    %v208 = vlaneseq
    %v209 = vshrl.u32 %v208, 7
    %v210 = vsub.s32 %v207, %v209
    %v211 = vrot.slane %v115, %v210
    %v212 = vadd.s32 %v207, 4294967288
    %v213 = vlaneseq
    %v214 = vshrl.u32 %v213, 7
    %v215 = vsub.s32 %v212, %v214
    %v216 = vrot.slane %v116, %v215
    %vm217 = vcmask 130112
    %v218 = vsel %vm217, %v216, %v211
    %v219 = vadd.s32 %v207, 4294967280
    %v220 = vlaneseq
    %v221 = vshrl.u32 %v220, 7
    %v222 = vsub.s32 %v219, %v221
    %v223 = vrot.slane %v117, %v222
    %vm224 = vcmask 195712
    %v225 = vsel %vm224, %v223, %v218
    %v226 = vadd.s32 %v207, 4294967272
    %v227 = vlaneseq
    %v228 = vshrl.u32 %v227, 7
    %v229 = vsub.s32 %v226, %v228
    %v230 = vrot.slane %v118, %v229
    %vm231 = vcmask 261312
    %v232 = vsel %vm231, %v230, %v225
    %v233 = vadd.s32 %v207, 4294967264
    %v234 = vlaneseq
    %v235 = vshrl.u32 %v234, 7
    %v236 = vsub.s32 %v233, %v235
    %v237 = vrot.slane %v119, %v236
    %vm238 = vcmask 326912
    %v239 = vsel %vm238, %v237, %v232
    %v240 = vadd.s32 %v207, 4294967256
    %v241 = vlaneseq
    %v242 = vshrl.u32 %v241, 7
    %v243 = vsub.s32 %v240, %v242
    %v244 = vrot.slane %v120, %v243
    %vm245 = vcmask 392512
    %v246 = vsel %vm245, %v244, %v239
    %v247 = vadd.s32 %v207, 4294967248
    %v248 = vlaneseq
    %v249 = vshrl.u32 %v248, 7
    %v250 = vsub.s32 %v247, %v249
    %v251 = vrot.slane %v121, %v250
    %vm252 = vcmask 458112
    %v253 = vsel %vm252, %v251, %v246
    %v254 = vadd.s32 %v207, 4294967240
    %v255 = vlaneseq
    %v256 = vshrl.u32 %v255, 7
    %v257 = vsub.s32 %v254, %v256
    %v258 = vrot.slane %v122, %v257
    %vm259 = vcmask 523712
    %v260 = vsel %vm259, %v258, %v253
    %v261 = vlaneseq
    %v262 = vshrl.u32 %v261, 7
    %v263 = vsub.s32 %v207, %v262
    %v264 = vrot.slane %v123, %v263
    %v265 = vlaneseq
    %v266 = vshrl.u32 %v265, 7
    %v267 = vsub.s32 %v212, %v266
    %v268 = vrot.slane %v124, %v267
    %v269 = vsel %vm217, %v268, %v264
    %v270 = vlaneseq
    %v271 = vshrl.u32 %v270, 7
    %v272 = vsub.s32 %v219, %v271
    %v273 = vrot.slane %v125, %v272
    %v274 = vsel %vm224, %v273, %v269
    %v275 = vlaneseq
    %v276 = vshrl.u32 %v275, 7
    %v277 = vsub.s32 %v226, %v276
    %v278 = vrot.slane %v126, %v277
    %v279 = vsel %vm231, %v278, %v274
    %v280 = vlaneseq
    %v281 = vshrl.u32 %v280, 7
    %v282 = vsub.s32 %v233, %v281
    %v283 = vrot.slane %v127, %v282
    %v284 = vsel %vm238, %v283, %v279
    %v285 = vlaneseq
    %v286 = vshrl.u32 %v285, 7
    %v287 = vsub.s32 %v240, %v286
    %v288 = vrot.slane %v128, %v287
    %v289 = vsel %vm245, %v288, %v284
    %v290 = vlaneseq
    %v291 = vshrl.u32 %v290, 7
    %v292 = vsub.s32 %v247, %v291
    %v293 = vrot.slane %v129, %v292
    %v294 = vsel %vm252, %v293, %v289
    %v295 = vlaneseq
    %v296 = vshrl.u32 %v295, 7
    %v297 = vsub.s32 %v254, %v296
    %v298 = vrot.slane %v130, %v297
    %v299 = vsel %vm259, %v298, %v294
    %vm300 = vcmask 1041409
    %v301 = vsel %vm300, %v299, %v260
    %v319 = vlaneseq
    %v320 = vshrl.u32 %v319, 7
    %v321 = vsub.s32 %v207, %v320
    %v322 = vrot.slane %v133, %v321
    %v323 = vlaneseq
    %v324 = vshrl.u32 %v323, 7
    %v325 = vsub.s32 %v212, %v324
    %v326 = vrot.slane %v136, %v325
    %v327 = vsel %vm217, %v326, %v322
    %v328 = vlaneseq
    %v329 = vshrl.u32 %v328, 7
    %v330 = vsub.s32 %v219, %v329
    %v331 = vrot.slane %v139, %v330
    %v332 = vsel %vm224, %v331, %v327
    %v333 = vlaneseq
    %v334 = vshrl.u32 %v333, 7
    %v335 = vsub.s32 %v226, %v334
    %v336 = vrot.slane %v142, %v335
    %v337 = vsel %vm231, %v336, %v332
    %v338 = vlaneseq
    %v339 = vshrl.u32 %v338, 7
    %v340 = vsub.s32 %v233, %v339
    %v341 = vrot.slane %v145, %v340
    %v342 = vsel %vm238, %v341, %v337
    %v343 = vlaneseq
    %v344 = vshrl.u32 %v343, 7
    %v345 = vsub.s32 %v240, %v344
    %v346 = vrot.slane %v148, %v345
    %v347 = vsel %vm245, %v346, %v342
    %v348 = vlaneseq
    %v349 = vshrl.u32 %v348, 7
    %v350 = vsub.s32 %v247, %v349
    %v351 = vrot.slane %v151, %v350
    %v352 = vsel %vm252, %v351, %v347
    %v353 = vlaneseq
    %v354 = vshrl.u32 %v353, 7
    %v355 = vsub.s32 %v254, %v354
    %v356 = vrot.slane %v154, %v355
    %v357 = vsel %vm259, %v356, %v352
    %v358 = vlaneseq
    %v359 = vshrl.u32 %v358, 7
    %v360 = vsub.s32 %v207, %v359
    %v361 = vrot.slane %v157, %v360
    %v362 = vlaneseq
    %v363 = vshrl.u32 %v362, 7
    %v364 = vsub.s32 %v212, %v363
    %v365 = vrot.slane %v160, %v364
    %v366 = vsel %vm217, %v365, %v361
    %v367 = vlaneseq
    %v368 = vshrl.u32 %v367, 7
    %v369 = vsub.s32 %v219, %v368
    %v370 = vrot.slane %v163, %v369
    %v371 = vsel %vm224, %v370, %v366
    %v372 = vlaneseq
    %v373 = vshrl.u32 %v372, 7
    %v374 = vsub.s32 %v226, %v373
    %v375 = vrot.slane %v166, %v374
    %v376 = vsel %vm231, %v375, %v371
    %v377 = vlaneseq
    %v378 = vshrl.u32 %v377, 7
    %v379 = vsub.s32 %v233, %v378
    %v380 = vrot.slane %v169, %v379
    %v381 = vsel %vm238, %v380, %v376
    %v382 = vlaneseq
    %v383 = vshrl.u32 %v382, 7
    %v384 = vsub.s32 %v240, %v383
    %v385 = vrot.slane %v172, %v384
    %v386 = vsel %vm245, %v385, %v381
    %v387 = vlaneseq
    %v388 = vshrl.u32 %v387, 7
    %v389 = vsub.s32 %v247, %v388
    %v390 = vrot.slane %v175, %v389
    %v391 = vsel %vm252, %v390, %v386
    %v392 = vlaneseq
    %v393 = vshrl.u32 %v392, 7
    %v394 = vsub.s32 %v254, %v393
    %v395 = vrot.slane %v178, %v394
    %v396 = vsel %vm259, %v395, %v391
    %vm397 = vcmask 1043459
    %v398 = vsel %vm397, %v396, %v357
    %vm400 = vcmask 1041408
    %v401 = vsel %vm400, %v301, %v398
    %v403 = vlaneseq
    %v404 = vshrl.u32 %v403, 7
    %v405 = vsub.s32 0, %v404
    %v406 = vrot.slane %v187, %v405
    %vm408 = vcmask 523264
    %v410 = vsel %vm408, %v401, 0
    %412 = vmatprep.subr.mxu0 0.0
    %413 = vmatpush1.msra.mxu0 %v179
    %414 = vmatprep.subr.mxu0 0.0
    %415 = vmatpush1.msra.mxu0 %v180
    %416 = vmatprep.subr.mxu0 0.0
    %417 = vmatpush1.msra.mxu0 %v181
    %418 = vmatprep.subr.mxu0 0.0
    %419 = vmatpush1.msra.mxu0 %v182
    %420 = vmatprep.subr.mxu0 0.0
    %421 = vmatpush1.msra.mxu0 %v183
    %422 = vmatprep.subr.mxu0 0.0
    %423 = vmatpush1.msra.mxu0 %v184
    %424 = vmatprep.subr.mxu0 0.0
    %425 = vmatpush1.msra.mxu0 %v185
    %426 = vmatprep.subr.mxu0 0.0
    %427 = vmatpush1.msra.mxu0 %v186
    %428 = vmatprep.subr.mxu0 0.0
    %429 = vmatpush1.msra.mxu0 0.0
    %430 = vmatprep.subr.mxu0 0.0
    %431 = vmatpush1.msra.mxu0 0.0
    %432 = vmatprep.subr.mxu0 0.0
    %433 = vmatpush1.msra.mxu0 0.0
    %434 = vmatprep.subr.mxu0 0.0
    %435 = vmatpush1.msra.mxu0 0.0
    %436 = vmatprep.subr.mxu0 0.0
    %437 = vmatpush1.msra.mxu0 0.0
    %438 = vmatprep.subr.mxu0 0.0
    %439 = vmatpush1.msra.mxu0 0.0
    %440 = vmatprep.subr.mxu0 0.0
    %441 = vmatpush1.msra.mxu0 0.0
    %442 = vmatprep.subr.mxu0 0.0
    %443 = vmatpush1.msra.mxu0 0.0
    %444 = vmatprep.subr.mxu0 0.0
    %445 = vmatpush1.msra.mxu0 0.0
    %446 = vmatprep.subr.mxu0 0.0
    %447 = vmatpush1.msra.mxu0 0.0
    %448 = vmatprep.subr.mxu0 0.0
    %449 = vmatpush1.msra.mxu0 0.0
    %450 = vmatprep.subr.mxu0 0.0
    %451 = vmatpush1.msra.mxu0 0.0
    %452 = vmatprep.subr.mxu0 0.0
    %453 = vmatpush1.msra.mxu0 0.0
    %454 = vmatprep.subr.mxu0 0.0
    %455 = vmatpush1.msra.mxu0 0.0
    %456 = vmatprep.subr.mxu0 0.0
    %457 = vmatpush1.msra.mxu0 0.0
    %458 = vmatprep.subr.mxu0 0.0
    %459 = vmatpush1.msra.mxu0 0.0
    %460 = vmatprep.subr.mxu0 0.0
    %461 = vmatpush1.msra.mxu0 0.0
    %462 = vmatprep.subr.mxu0 0.0
    %463 = vmatpush1.msra.mxu0 0.0
    %464 = vmatprep.subr.mxu0 0.0
    %465 = vmatpush1.msra.mxu0 0.0
    %466 = vmatprep.subr.mxu0 0.0
    %467 = vmatpush1.msra.mxu0 0.0
    %468 = vmatprep.subr.mxu0 0.0
    %469 = vmatpush1.msra.mxu0 0.0
    %470 = vmatprep.subr.mxu0 0.0
    %471 = vmatpush1.msra.mxu0 0.0
    %472 = vmatprep.subr.mxu0 0.0
    %473 = vmatpush1.msra.mxu0 0.0
    %474 = vmatprep.subr.mxu0 0.0
    %475 = vmatpush1.msra.mxu0 0.0
    %476 = vmatprep.mubr.f32.mxu0 0.0
    %477 = vmatmul.mubr.f32.gmra.mrb[0].mxu0 %v410
    %v478 = vpop.f32.mrb[0].mxu0
    %v479 = vadd.f32 %v406, %v478
    %v480 = vpop.f32.mrb[0].mxu0
    %481 = vdwg.mxu0
    %v482 = vmax.f32 %v479, 0.0
    %v484 = vrot.slane %v482, 2
    %v486 = vadd.f32 %v482, %v484
    %v487 = vmul.f32 %v189, 2.0
    %v489 = vlaneseq
    %v490 = vshrl.u32 %v489, 7
    %v491 = vsub.s32 0, %v490
    %v492 = vrot.slane %v487, %v491
    %vm494 = vcmask 31744
    %v496 = vsel %vm494, %v486, 0
    %vm498 = vcmask 1043456
    %v500 = vsel %vm498, %v188, 0
    %502 = vmatprep.subr.mxu0 0.0
    %503 = vmatpush1.msra.mxu0 %v500
    %504 = vmatprep.subr.mxu0 0.0
    %505 = vmatpush1.msra.mxu0 0.0
    %506 = vmatprep.subr.mxu0 0.0
    %507 = vmatpush1.msra.mxu0 0.0
    %508 = vmatprep.subr.mxu0 0.0
    %509 = vmatpush1.msra.mxu0 0.0
    %510 = vmatprep.subr.mxu0 0.0
    %511 = vmatpush1.msra.mxu0 0.0
    %512 = vmatprep.subr.mxu0 0.0
    %513 = vmatpush1.msra.mxu0 0.0
    %514 = vmatprep.subr.mxu0 0.0
    %515 = vmatpush1.msra.mxu0 0.0
    %516 = vmatprep.subr.mxu0 0.0
    %517 = vmatpush1.msra.mxu0 0.0
    %518 = vmatprep.subr.mxu0 0.0
    %519 = vmatpush1.msra.mxu0 0.0
    %520 = vmatprep.subr.mxu0 0.0
    %521 = vmatpush1.msra.mxu0 0.0
    %522 = vmatprep.subr.mxu0 0.0
    %523 = vmatpush1.msra.mxu0 0.0
    %524 = vmatprep.subr.mxu0 0.0
    %525 = vmatpush1.msra.mxu0 0.0
    %526 = vmatprep.subr.mxu0 0.0
    %527 = vmatpush1.msra.mxu0 0.0
    %528 = vmatprep.subr.mxu0 0.0
    %529 = vmatpush1.msra.mxu0 0.0
    %530 = vmatprep.subr.mxu0 0.0
    %531 = vmatpush1.msra.mxu0 0.0
    %532 = vmatprep.subr.mxu0 0.0
    %533 = vmatpush1.msra.mxu0 0.0
    %534 = vmatprep.subr.mxu0 0.0
    %535 = vmatpush1.msra.mxu0 0.0
    %536 = vmatprep.subr.mxu0 0.0
    %537 = vmatpush1.msra.mxu0 0.0
    %538 = vmatprep.subr.mxu0 0.0
    %539 = vmatpush1.msra.mxu0 0.0
    %540 = vmatprep.subr.mxu0 0.0
    %541 = vmatpush1.msra.mxu0 0.0
    %542 = vmatprep.subr.mxu0 0.0
    %543 = vmatpush1.msra.mxu0 0.0
    %544 = vmatprep.subr.mxu0 0.0
    %545 = vmatpush1.msra.mxu0 0.0
    %546 = vmatprep.subr.mxu0 0.0
    %547 = vmatpush1.msra.mxu0 0.0
    %548 = vmatprep.subr.mxu0 0.0
    %549 = vmatpush1.msra.mxu0 0.0
    %550 = vmatprep.subr.mxu0 0.0
    %551 = vmatpush1.msra.mxu0 0.0
    %552 = vmatprep.subr.mxu0 0.0
    %553 = vmatpush1.msra.mxu0 0.0
    %554 = vmatprep.subr.mxu0 0.0
    %555 = vmatpush1.msra.mxu0 0.0
    %556 = vmatprep.subr.mxu0 0.0
    %557 = vmatpush1.msra.mxu0 0.0
    %558 = vmatprep.subr.mxu0 0.0
    %559 = vmatpush1.msra.mxu0 0.0
    %560 = vmatprep.subr.mxu0 0.0
    %561 = vmatpush1.msra.mxu0 0.0
    %562 = vmatprep.subr.mxu0 0.0
    %563 = vmatpush1.msra.mxu0 0.0
    %564 = vmatprep.subr.mxu0 0.0
    %565 = vmatpush1.msra.mxu0 0.0
    %566 = vmatprep.mubr.f32.mxu0 0.0
    %567 = vmatmul.mubr.f32.gmra.mrb[0].mxu0 %v496
    %v568 = vpop.f32.mrb[0].mxu0
    %v569 = vadd.f32 %v492, %v568
    %v570 = vpop.f32.mrb[0].mxu0
    %571 = vdwg.mxu0
    %v572 = vxor.u32 %v569, 2147483648
    %v573 = vmul.f32 %v572, 1.442695
    %v574 = vpow.pop %v573
    %v575 = vadd.f32 %v574, 1.0
    %v576 = vrcp.pop %v575
    %v577 = vmul.f32 1.0, %v576
    %v578 = vlaneseq
    %v579 = vshrl.u32 %v578, 7
    %v580 = vsub.s32 0, %v579
    %v581 = vrot.slane %v577, %v580
    %583 = vbcast.lane.b32.xlu0 %v581, 256
    %v584 = vpop.permute.xlu0 %583
    %s586 = sor.u32 256, 8
    %587 = vbcast.lane.b32.xlu0 %v581, %s586
    %v588 = vpop.permute.xlu0 %587
    %s590 = sor.u32 256, 16
    %591 = vbcast.lane.b32.xlu0 %v581, %s590
    %v592 = vpop.permute.xlu0 %591
    %s594 = sor.u32 256, 24
    %595 = vbcast.lane.b32.xlu0 %v581, %s594
    %v596 = vpop.permute.xlu0 %595
    %s598 = sor.u32 256, 32
    %599 = vbcast.lane.b32.xlu0 %v581, %s598
    %v600 = vpop.permute.xlu0 %599
    %s602 = sor.u32 256, 40
    %603 = vbcast.lane.b32.xlu0 %v581, %s602
    %v604 = vpop.permute.xlu0 %603
    %s606 = sor.u32 256, 48
    %607 = vbcast.lane.b32.xlu0 %v581, %s606
    %v608 = vpop.permute.xlu0 %607
    %s610 = sor.u32 256, 56
    %611 = vbcast.lane.b32.xlu0 %v581, %s610
    %v612 = vpop.permute.xlu0 %611
    %v613 = vlaneseq
    %v614 = vshrl.u32 %v613, 7
    %v615 = vsub.s32 1, %v614
    %v616 = vrot.slane %v577, %v615
    %618 = vbcast.lane.b32.xlu0 %v616, 256
    %v619 = vpop.permute.xlu0 %618
    %s621 = sor.u32 256, 8
    %622 = vbcast.lane.b32.xlu0 %v616, %s621
    %v623 = vpop.permute.xlu0 %622
    %s625 = sor.u32 256, 16
    %626 = vbcast.lane.b32.xlu0 %v616, %s625
    %v627 = vpop.permute.xlu0 %626
    %s629 = sor.u32 256, 24
    %630 = vbcast.lane.b32.xlu0 %v616, %s629
    %v631 = vpop.permute.xlu0 %630
    %s633 = sor.u32 256, 32
    %634 = vbcast.lane.b32.xlu0 %v616, %s633
    %v635 = vpop.permute.xlu0 %634
    %s637 = sor.u32 256, 40
    %638 = vbcast.lane.b32.xlu0 %v616, %s637
    %v639 = vpop.permute.xlu0 %638
    %s641 = sor.u32 256, 48
    %642 = vbcast.lane.b32.xlu0 %v616, %s641
    %v643 = vpop.permute.xlu0 %642
    %s645 = sor.u32 256, 56
    %646 = vbcast.lane.b32.xlu0 %v616, %s645
    %v647 = vpop.permute.xlu0 %646
    %v648 = vmul.f32 %v35, %v584
    %v649 = vmul.f32 %v36, %v584
    %v650 = vmul.f32 %v37, %v588
    %v651 = vmul.f32 %v38, %v588
    %v652 = vmul.f32 %v39, %v592
    %v653 = vmul.f32 %v40, %v592
    %v654 = vmul.f32 %v41, %v596
    %v655 = vmul.f32 %v42, %v596
    %v656 = vmul.f32 %v43, %v600
    %v657 = vmul.f32 %v44, %v600
    %v658 = vmul.f32 %v45, %v604
    %v659 = vmul.f32 %v46, %v604
    %v660 = vmul.f32 %v47, %v608
    %v661 = vmul.f32 %v48, %v608
    %v662 = vmul.f32 %v49, %v612
    %v663 = vmul.f32 %v50, %v612
    %v664 = vmul.f32 %v51, %v619
    %v665 = vmul.f32 %v52, %v619
    %v666 = vmul.f32 %v53, %v623
    %v667 = vmul.f32 %v54, %v623
    %v668 = vmul.f32 %v55, %v627
    %v669 = vmul.f32 %v56, %v627
    %v670 = vmul.f32 %v57, %v631
    %v671 = vmul.f32 %v58, %v631
    %v672 = vmul.f32 %v59, %v635
    %v673 = vmul.f32 %v60, %v635
    %v674 = vmul.f32 %v61, %v639
    %v675 = vmul.f32 %v62, %v639
    %v676 = vmul.f32 %v63, %v643
    %v677 = vmul.f32 %v64, %v643
    %v678 = vmul.f32 %v65, %v647
    %v679 = vmul.f32 %v66, %v647
    %680 = vst [vmem:[#allocation5] sm:$0xff] %v648
    %681 = vst [vmem:[#allocation5 + $0x8] sm:$0xff] %v649
    %682 = vst [vmem:[#allocation5 + $0x10] sm:$0xff] %v650
    %683 = vst [vmem:[#allocation5 + $0x18] sm:$0xff] %v651
    %684 = vst [vmem:[#allocation5 + $0x20] sm:$0xff] %v652
    %685 = vst [vmem:[#allocation5 + $0x28] sm:$0xff] %v653
    %686 = vst [vmem:[#allocation5 + $0x30] sm:$0xff] %v654
    %687 = vst [vmem:[#allocation5 + $0x38] sm:$0xff] %v655
    %688 = vst [vmem:[#allocation5 + $0x40] sm:$0xff] %v656
    %689 = vst [vmem:[#allocation5 + $0x48] sm:$0xff] %v657
    %690 = vst [vmem:[#allocation5 + $0x50] sm:$0xff] %v658
    %691 = vst [vmem:[#allocation5 + $0x58] sm:$0xff] %v659
    %692 = vst [vmem:[#allocation5 + $0x60] sm:$0xff] %v660
    %693 = vst [vmem:[#allocation5 + $0x68] sm:$0xff] %v661
    %694 = vst [vmem:[#allocation5 + $0x70] sm:$0xff] %v662
    %695 = vst [vmem:[#allocation5 + $0x78] sm:$0xff] %v663
    %696 = vst [vmem:[#allocation5 + $0x80] sm:$0xff] %v664
    %697 = vst [vmem:[#allocation5 + $0x88] sm:$0xff] %v665
    %698 = vst [vmem:[#allocation5 + $0x90] sm:$0xff] %v666
    %699 = vst [vmem:[#allocation5 + $0x98] sm:$0xff] %v667
    %700 = vst [vmem:[#allocation5 + $0xa0] sm:$0xff] %v668
    %701 = vst [vmem:[#allocation5 + $0xa8] sm:$0xff] %v669
    %702 = vst [vmem:[#allocation5 + $0xb0] sm:$0xff] %v670
    %703 = vst [vmem:[#allocation5 + $0xb8] sm:$0xff] %v671
    %704 = vst [vmem:[#allocation5 + $0xc0] sm:$0xff] %v672
    %705 = vst [vmem:[#allocation5 + $0xc8] sm:$0xff] %v673
    %706 = vst [vmem:[#allocation5 + $0xd0] sm:$0xff] %v674
    %707 = vst [vmem:[#allocation5 + $0xd8] sm:$0xff] %v675
    %708 = vst [vmem:[#allocation5 + $0xe0] sm:$0xff] %v676
    %709 = vst [vmem:[#allocation5 + $0xe8] sm:$0xff] %v677
    %710 = vst [vmem:[#allocation5 + $0xf0] sm:$0xff] %v678
    %711 = vst [vmem:[#allocation5 + $0xf8] sm:$0xff] %v679
    // Predicated region
    $region26: #{tpu_custom_call.1} parent=1 // pred_check
      _
    $region27: #{tpu_custom_call.1} parent=1 // pred_check_branch
      %713 = sbr.rel (0) target = $region29
    $region28: #{tpu_custom_call.1} parent=1 // pred_region
      %s715 = ssub.s32 4096, 4096
      %716 = vsyncadd [#allocation4], %s715
      %s717 = sshll.u32 [#allocation5], 4
      %s718 = int_to_ptr.vmem [resolvable:$true] %s717
      %723 = dma.vmem_to_hbm [thread:$0]  %s718, 4096, %s5, [#allocation4], 256, 256, 16
    $region29: #{tpu_custom_call.1} parent=1 // pred_fallthru
      _
    // Predicated region
    $region30: #{tpu_custom_call.1} parent=1 // pred_check
      _
    $region31: #{tpu_custom_call.1} parent=1 // pred_check_branch
      %725 = sbr.rel (0) target = $region33
    $region32: #{tpu_custom_call.1} parent=1 // pred_region
      %726 = dma.done [#allocation4], 4096
    $region33: #{tpu_custom_call.1} parent=1 // pred_fallthru
      _
    %727 = vsyncpa [#allocation3], 1
    %728 = vsyncpa [#allocation4], 1

</llo_original>
